<compile_context>
chip_gen: v6e
topology: v6e:2x2x1
jax: 0.10.0
libtpu: 0.0.40
codegen_flags: <defaults>
</compile_context>

<pallas_src>
import functools

import jax
import jax.numpy as jnp
from jax.experimental import pallas as pl
from jax.experimental.pallas import tpu as pltpu

_LANE = 128
_SUBLANE = 8


def _critic_kernel(x_ref, w1_ref, b1_ref, w2_ref, b2_ref, o_ref, *,
                   approx_sigmoid):
    # First linear + tanh (MXU matmul, f32 accumulation; tanh on EUP in f32).
    h = jnp.dot(x_ref[...], w1_ref[...], preferred_element_type=jnp.float32)
    h = jnp.tanh(h + b1_ref[...].astype(jnp.float32))
    # Second linear + sigmoid; output tile is lane-dense (padded to 128 wide).
    z = jnp.dot(h.astype(w2_ref.dtype), w2_ref[...],
                preferred_element_type=jnp.float32)
    z = z + b2_ref[...].astype(jnp.float32)
    if approx_sigmoid:
        # EUP-only epilogue: exp + approx reciprocal keep the VALU slot free.
        e = jnp.exp(-z)
        s = pl.reciprocal(1.0 + e, approx=True)
    else:
        s = jax.nn.sigmoid(z)
    o_ref[...] = s.astype(o_ref.dtype)


def _round_up(n, m):
    return ((n + m - 1) // m) * m


def _resident_spec(block_shape):
    """Grid-invariant operand: constant index_map + single buffering."""
    return pl.BlockSpec(block_shape, lambda i: (0, 0),
                        pipeline_mode=pl.Buffered(1))


def linear_critic_forward(x, w1, b1, w2, b2, *, block_b=512,
                          compute_dtype=jnp.bfloat16,
                          vmem_limit_bytes=None):
    """sigmoid(tanh(x @ w1 + b1) @ w2 + b2).

    x: (B, D); w1: (D, D); b1: (1, D); w2: (D, A); b2: (1, A) -> (B, A).
    compute_dtype: dtype for x/w1/w2 on the MXU (accumulation and activations
    stay f32).  Default bf16; pass None for a strict f32 path.
    """
    B, D = x.shape
    A = w2.shape[1]
    out_dtype = x.dtype

    use_lowp = compute_dtype is not None and jnp.dtype(compute_dtype) != jnp.float32
    if compute_dtype is not None:
        x = x.astype(compute_dtype)
        w1 = w1.astype(compute_dtype)
        w2 = w2.astype(compute_dtype)

    # Lane-dense output: pad action dim to a multiple of 128 so the store is an
    # unmasked vst.  Zero-padded w2/b2 columns yield sigmoid(0)=0.5; sliced off
    # below (only the sliced wrapper output is valid).
    A_pad = _round_up(A, _LANE)
    if A_pad != A:
        w2 = jnp.pad(w2, ((0, 0), (0, A_pad - A)))
        b2 = jnp.pad(b2, ((0, 0), (0, A_pad - A)))

    # Batch tile: sublane-aligned, <= block_b, and aiming for >= 4 grid steps
    # when B is large so the "parallel" batch axis gives v7x's second
    # TensorCore work.  No HBM-side padding of x: partial last block is fine
    # (independent rows, clipped writes).
    min_steps = 4
    tb = min(block_b, _round_up(pl.cdiv(B, min_steps), _SUBLANE))
    tb = max(_SUBLANE, min(tb, _round_up(B, _SUBLANE)))
    grid = (pl.cdiv(B, tb),)

    if vmem_limit_bytes is None:
        # Single-buffered weights/biases + double-buffered x/out tiles + slack.
        w_bytes = (w1.size * w1.dtype.itemsize + w2.size * w2.dtype.itemsize
                   + b1.size * b1.dtype.itemsize + b2.size * b2.dtype.itemsize)
        tile_bytes = 2 * (tb * D * x.dtype.itemsize
                          + tb * A_pad * jnp.dtype(out_dtype).itemsize)
        est = w_bytes + tile_bytes + (4 << 20)
        # 32 MiB floor; 48 MiB cap keeps v7x (64 MiB physical) safe.  Raise
        # toward ~96 MiB explicitly on v5e/v6e (128 MiB physical) for large D.
        vmem_limit_bytes = max(32 << 20, min(48 << 20, est))

    kernel = functools.partial(_critic_kernel, approx_sigmoid=use_lowp)

    out = pl.pallas_call(
        kernel,
        out_shape=jax.ShapeDtypeStruct((B, A_pad), out_dtype),
        grid=grid,
        in_specs=[
            pl.BlockSpec((tb, D), lambda i: (i, 0)),   # x: batch-tiled
            _resident_spec((D, D)),                    # w1: VMEM-resident
            _resident_spec((1, D)),                    # b1
            _resident_spec((D, A_pad)),                # w2
            _resident_spec((1, A_pad)),                # b2
        ],
        out_specs=pl.BlockSpec((tb, A_pad), lambda i: (i, 0)),
        compiler_params=pltpu.CompilerParams(
            dimension_semantics=("parallel",),   # shards batch across TCs on v7x
            vmem_limit_bytes=vmem_limit_bytes,
        ),
    )(x, w1, b1, w2, b2)

    return out[:, :A] if A_pad != A else out


def init_params(key, input_dim, action_num, dtype=jnp.float32):
    """Deterministic init matching torch nn.Linear shapes (stored transposed)."""
    k1, k2, k3, k4 = jax.random.split(key, 4)
    bound1 = 1.0 / (input_dim ** 0.5)
    w1 = jax.random.uniform(k1, (input_dim, input_dim), dtype, -bound1, bound1)
    b1 = jax.random.uniform(k2, (1, input_dim), dtype, -bound1, bound1)
    bound2 = 1.0 / (input_dim ** 0.5)
    w2 = jax.random.uniform(k3, (input_dim, action_num), dtype, -bound2, bound2)
    b2 = jax.random.uniform(k4, (1, action_num), dtype, -bound2, bound2)
    return w1, b1, w2, b2


def reference_forward(x, w1, b1, w2, b2):
    h = jnp.tanh(x @ w1 + b1)
    return jax.nn.sigmoid(h @ w2 + b2)


if __name__ == "__main__":
    batch = 8
    input_dim = 32
    action_num = 4

    key = jax.random.PRNGKey(0)
    kx, kp = jax.random.split(key)
    x = jax.random.normal(kx, (batch, input_dim), jnp.float32)
    w1, b1, w2, b2 = init_params(kp, input_dim, action_num)
    ref = reference_forward(x, w1, b1, w2, b2)

    # Default (bf16 MXU inputs, f32 accumulation/activations) -> loose tol.
    out = jax.block_until_ready(linear_critic_forward(x, w1, b1, w2, b2))
    assert out.shape == (batch, action_num)
    assert jnp.allclose(out, ref, atol=3e-2, rtol=3e-2)

    # Strict f32 path.
    out_f32 = jax.block_until_ready(
        linear_critic_forward(x, w1, b1, w2, b2, compute_dtype=None))
    assert out_f32.shape == (batch, action_num)
    assert jnp.allclose(out_f32, ref, atol=1e-5, rtol=1e-5)

    # Multi-tile batch with a partial last block (no HBM-side padding of x).
    x_big = jax.random.normal(kx, (37, input_dim), jnp.float32)
    ref_big = reference_forward(x_big, w1, b1, w2, b2)
    out_big = jax.block_until_ready(
        linear_critic_forward(x_big, w1, b1, w2, b2, block_b=16,
                              compute_dtype=None))
    assert out_big.shape == (37, action_num)
    assert jnp.allclose(out_big, ref_big, atol=1e-5, rtol=1e-5)

    print("KERNEL_OK")
</pallas_src>

<mosaic_0001>
module attributes {stable_mosaic.version = 11 : i64} {
  func.func @_critic_kernel(%arg0: i32, %arg1: memref<8x32xbf16, #tpu.memory_space<vmem>>, %arg2: memref<32x32xbf16, #tpu.memory_space<vmem>>, %arg3: memref<1x32xf32, #tpu.memory_space<vmem>>, %arg4: memref<32x128xbf16, #tpu.memory_space<vmem>>, %arg5: memref<1x128xf32, #tpu.memory_space<vmem>>, %arg6: memref<8x128xf32, #tpu.memory_space<vmem>>) attributes {dimension_semantics = [#tpu.dimension_semantics<parallel>], iteration_bounds = array<i64: 1>, scalar_prefetch = 0 : i64, scratch_operands = 0 : i64, tpu.core_type = #tpu.core_type<tc>, window_params = [{transform_indices = @transform_0, window_bounds = array<i64: 8, 32>}, {pipeline_mode = #tpu.pipeline_mode<synchronous>, transform_indices = @transform_1, window_bounds = array<i64: 32, 32>}, {pipeline_mode = #tpu.pipeline_mode<synchronous>, transform_indices = @transform_2, window_bounds = array<i64: 1, 32>}, {pipeline_mode = #tpu.pipeline_mode<synchronous>, transform_indices = @transform_3, window_bounds = array<i64: 32, 128>}, {pipeline_mode = #tpu.pipeline_mode<synchronous>, transform_indices = @transform_4, window_bounds = array<i64: 1, 128>}, {transform_indices = @transform_5, window_bounds = array<i64: 8, 128>}]} {
    %c0 = arith.constant 0 : index
    %c0_0 = arith.constant 0 : index
    %0 = vector.load %arg1[%c0, %c0_0] : memref<8x32xbf16, #tpu.memory_space<vmem>>, vector<8x32xbf16>
    %c0_1 = arith.constant 0 : index
    %c0_2 = arith.constant 0 : index
    %1 = vector.load %arg2[%c0_1, %c0_2] : memref<32x32xbf16, #tpu.memory_space<vmem>>, vector<32x32xbf16>
    %cst = arith.constant dense<0.000000e+00> : vector<8x32xf32>
    %2 = tpu.matmul %0, %1, %cst {dimension_numbers = #tpu.dot_dimension_numbers<[1], [0], [0], [1], [0, 0, 1, 1], [], []>} : vector<8x32xbf16>, vector<32x32xbf16>, vector<8x32xf32> -> vector<8x32xf32>
    %c0_3 = arith.constant 0 : index
    %c0_4 = arith.constant 0 : index
    %3 = vector.load %arg3[%c0_3, %c0_4] : memref<1x32xf32, #tpu.memory_space<vmem>>, vector<1x32xf32>
    %4 = vector.broadcast %3 : vector<1x32xf32> to vector<8x32xf32>
    %5 = arith.addf %2, %4 : vector<8x32xf32>
    %6 = math.tanh %5 : vector<8x32xf32>
    %7 = arith.truncf %6 : vector<8x32xf32> to vector<8x32xbf16>
    %c0_5 = arith.constant 0 : index
    %c0_6 = arith.constant 0 : index
    %8 = vector.load %arg4[%c0_5, %c0_6] : memref<32x128xbf16, #tpu.memory_space<vmem>>, vector<32x128xbf16>
    %cst_7 = arith.constant dense<0.000000e+00> : vector<8x128xf32>
    %9 = tpu.matmul %7, %8, %cst_7 {dimension_numbers = #tpu.dot_dimension_numbers<[1], [0], [0], [1], [0, 0, 1, 1], [], []>} : vector<8x32xbf16>, vector<32x128xbf16>, vector<8x128xf32> -> vector<8x128xf32>
    %c0_8 = arith.constant 0 : index
    %c0_9 = arith.constant 0 : index
    %10 = vector.load %arg5[%c0_8, %c0_9] : memref<1x128xf32, #tpu.memory_space<vmem>>, vector<1x128xf32>
    %11 = vector.broadcast %10 : vector<1x128xf32> to vector<8x128xf32>
    %12 = arith.addf %9, %11 : vector<8x128xf32>
    %cst_10 = arith.constant 0.000000e+00 : f32
    %13 = vector.broadcast %cst_10 : f32 to vector<8x128xf32>
    %14 = arith.subf %13, %12 : vector<8x128xf32>
    %15 = math.exp %14 : vector<8x128xf32>
    %cst_11 = arith.constant 1.000000e+00 : f32
    %16 = vector.broadcast %cst_11 : f32 to vector<8x128xf32>
    %17 = arith.addf %16, %15 : vector<8x128xf32>
    %18 = tpu.reciprocal %17 {approx = true} : vector<8x128xf32> -> vector<8x128xf32>
    %c0_12 = arith.constant 0 : index
    %c0_13 = arith.constant 0 : index
    %19 = vector.load %arg6[%c0_12, %c0_13] : memref<8x128xf32, #tpu.memory_space<vmem>>, vector<8x128xf32>
    tpu.vector_store %arg6[%c0_12, %c0_13], %18 {strides = array<i32>} : memref<8x128xf32, #tpu.memory_space<vmem>>, vector<8x128xf32>,
    return
  }
  func.func @transform_0(%arg0: i32) -> (i32, i32) {
    %c0_i32 = arith.constant 0 : i32
    %c0_i32_0 = arith.constant 0 : i32
    return %arg0, %c0_i32 : i32, i32
  }
  func.func @transform_1(%arg0: i32) -> (i32, i32) {
    %c0_i32 = arith.constant 0 : i32
    %c0_i32_0 = arith.constant 0 : i32
    %c0_i32_1 = arith.constant 0 : i32
    return %c0_i32, %c0_i32_0 : i32, i32
  }
  func.func @transform_2(%arg0: i32) -> (i32, i32) {
    %c0_i32 = arith.constant 0 : i32
    %c0_i32_0 = arith.constant 0 : i32
    %c0_i32_1 = arith.constant 0 : i32
    return %c0_i32, %c0_i32_0 : i32, i32
  }
  func.func @transform_3(%arg0: i32) -> (i32, i32) {
    %c0_i32 = arith.constant 0 : i32
    %c0_i32_0 = arith.constant 0 : i32
    %c0_i32_1 = arith.constant 0 : i32
    return %c0_i32, %c0_i32_0 : i32, i32
  }
  func.func @transform_4(%arg0: i32) -> (i32, i32) {
    %c0_i32 = arith.constant 0 : i32
    %c0_i32_0 = arith.constant 0 : i32
    %c0_i32_1 = arith.constant 0 : i32
    return %c0_i32, %c0_i32_0 : i32, i32
  }
  func.func @transform_5(%arg0: i32) -> (i32, i32) {
    %c0_i32 = arith.constant 0 : i32
    %c0_i32_0 = arith.constant 0 : i32
    return %arg0, %c0_i32 : i32, i32
  }
}

</mosaic_0001>

<llo_original>
// kernel: tpu_custom_call.1
$region0: #{tpu_custom_call.1}
  #allocation0 [shape = 'u32[]', space=smem, size = 0x4, offset = 0x4, fixed_abs, tag = 'smem constant byte address 0x4 - core index']
  #allocation1 [shape = 'u32[144,128]{1,0:T(1,128)}', space=vmem, size = 0x12000, scoped, tag = 'internal scratch']
  %s0 = inlined_call_operand.hbm [shape: bf16[8,32], index: 0, kind: input, shape index: {}]
  %s1 = inlined_call_operand.hbm [shape: bf16[32,32], index: 1, kind: input, shape index: {}]
  %s2 = inlined_call_operand.vmem [shape: f32[1,32], index: 2, kind: input, shape index: {}]
  %s3 = inlined_call_operand.hbm [shape: bf16[32,128], index: 3, kind: input, shape index: {}]
  %s4 = inlined_call_operand.vmem [shape: f32[1,128], index: 4, kind: input, shape index: {}]
  %s5 = inlined_call_operand.hbm [shape: f32[8,128], index: 5, kind: output, shape index: {}]
  %s6 = sld [smem:[#allocation0]]
  $region42: #{tpu_custom_call.1} parent=0
    _
  %s8 = ssub.s32 1, %s6
  %s9 = scalar_select 0, %s8, %s6
  $region1: #{tpu_custom_call.1} parent=0
    #allocation2 [shape = 'u8[2048]{0}', space=vmem, size = 0x800, scoped, tag = 'input window, operand 0, single buffered']
    #allocation3 [shape = 's32[1]{0}', space=sflag, size = 0x4, scoped, tag = 'scoped memory for tpu_custom_call.1']
    #allocation4 [shape = 's32[1]{0}', space=sflag, size = 0x4, scoped, tag = 'scoped memory for tpu_custom_call.1']
    #allocation5 [shape = 'u8[8192]{0}', space=vmem, size = 0x2000, scoped, tag = 'input window, operand 1, single buffered']
    #allocation6 [shape = 's32[1]{0}', space=sflag, size = 0x4, scoped, tag = 'scoped memory for tpu_custom_call.1']
    #allocation7 [shape = 'u8[8192]{0}', space=vmem, size = 0x2000, scoped, tag = 'input window, operand 3, single buffered']
    #allocation8 [shape = 'u8[4096]{0}', space=vmem, size = 0x1000, scoped, tag = 'output window, operand 0, single buffered']
    %10 = vsyncpa [#allocation3], 0
    %11 = vsyncpa [#allocation6], 0
    %12 = vsyncpa [#allocation4], 0
    // Predicated region
    $region2: #{tpu_custom_call.1} parent=1 // pred_check
      _
    $region3: #{tpu_custom_call.1} parent=1 // pred_check_branch
      %14 = sbr.rel (0) target = $region5
    $region4: #{tpu_custom_call.1} parent=1 // pred_region
      %s16 = ssub.s32 64, 64
      %17 = vsyncadd [#allocation3], %s16
      %s19 = sshll.u32 [#allocation2], 4
      %s20 = int_to_ptr.vmem [resolvable:$true] %s19
      %22 = dma.hbm_to_vmem [thread:$0]  %s0, 64, %s20, [#allocation3]
    $region5: #{tpu_custom_call.1} parent=1 // pred_fallthru
      _
    // Predicated region
    $region6: #{tpu_custom_call.1} parent=1 // pred_check
      _
    $region7: #{tpu_custom_call.1} parent=1 // pred_check_branch
      %24 = sbr.rel (0) target = $region9
    $region8: #{tpu_custom_call.1} parent=1 // pred_region
      %s26 = ssub.s32 256, 256
      %27 = vsyncadd [#allocation6], %s26
      %s28 = sshll.u32 [#allocation5], 4
      %s29 = int_to_ptr.vmem [resolvable:$true] %s28
      %34 = dma.hbm_to_vmem [thread:$0]  %s1, 256, %s29, [#allocation6], 64, 64, 4
    $region9: #{tpu_custom_call.1} parent=1 // pred_fallthru
      _
    // Predicated region
    $region10: #{tpu_custom_call.1} parent=1 // pred_check
      _
    $region11: #{tpu_custom_call.1} parent=1 // pred_check_branch
      %36 = sbr.rel (0) target = $region13
    $region12: #{tpu_custom_call.1} parent=1 // pred_region
      _
    $region13: #{tpu_custom_call.1} parent=1 // pred_fallthru
      _
    // Predicated region
    $region14: #{tpu_custom_call.1} parent=1 // pred_check
      _
    $region15: #{tpu_custom_call.1} parent=1 // pred_check_branch
      %38 = sbr.rel (0) target = $region17
    $region16: #{tpu_custom_call.1} parent=1 // pred_region
      %s40 = ssub.s32 256, 256
      %41 = vsyncadd [#allocation6], %s40
      %s42 = sshll.u32 [#allocation7], 4
      %s43 = int_to_ptr.vmem [resolvable:$true] %s42
      %48 = dma.hbm_to_vmem [thread:$0]  %s3, 256, %s43, [#allocation6], 64, 64, 4
    $region17: #{tpu_custom_call.1} parent=1 // pred_fallthru
      _
    // Predicated region
    $region18: #{tpu_custom_call.1} parent=1 // pred_check
      _
    $region19: #{tpu_custom_call.1} parent=1 // pred_check_branch
      %50 = sbr.rel (0) target = $region21
    $region20: #{tpu_custom_call.1} parent=1 // pred_region
      _
    $region21: #{tpu_custom_call.1} parent=1 // pred_fallthru
      _
    // Predicated region
    $region22: #{tpu_custom_call.1} parent=1 // pred_check
      _
    $region23: #{tpu_custom_call.1} parent=1 // pred_check_branch
      %52 = sbr.rel (0) target = $region25
    $region24: #{tpu_custom_call.1} parent=1 // pred_region
      %53 = dma.done [#allocation3], 64
    $region25: #{tpu_custom_call.1} parent=1 // pred_fallthru
      _
    // Predicated region
    $region26: #{tpu_custom_call.1} parent=1 // pred_check
      _
    $region27: #{tpu_custom_call.1} parent=1 // pred_check_branch
      %55 = sbr.rel (0) target = $region29
    $region28: #{tpu_custom_call.1} parent=1 // pred_region
      %56 = dma.done [#allocation6], 256
    $region29: #{tpu_custom_call.1} parent=1 // pred_fallthru
      _
    // Predicated region
    $region30: #{tpu_custom_call.1} parent=1 // pred_check
      _
    $region31: #{tpu_custom_call.1} parent=1 // pred_check_branch
      %58 = sbr.rel (0) target = $region33
    $region32: #{tpu_custom_call.1} parent=1 // pred_region
      %59 = dma.done [#allocation6], 256
    $region33: #{tpu_custom_call.1} parent=1 // pred_fallthru
      _
    %v61 = vld [vmem:[#allocation2] sm:$0xf]
    %v62 = vld [vmem:[#allocation5] sm:$0xf]
    %v63 = vld [vmem:[#allocation5 + $0x4] sm:$0xf]
    %v64 = vld [vmem:[#allocation5 + $0x8] sm:$0xf]
    %v65 = vld [vmem:[#allocation5 + $0xc] sm:$0xf]
    %v66 = vld [vmem:[%s2] sm:$0x1]
    %v68 = vlaneseq
    %v69 = vshrl.u32 %v68, 7
    %v70 = vsub.s32 0, %v69
    %v71 = vrot.slane %v66, %v70
    %v77 = vunpack.c.l.b16 %v62
    %v78 = vunpack.c.l.b16 %v63
    %v79 = vunpack.c.l.b16 %v64
    %v80 = vunpack.c.l.b16 %v65
    %v81 = vpack.c.b16 %v78, %v77
    %v82 = vpack.c.b16 %v80, %v79
    %vm85 = vcmask 261120
    %v87 = vsel %vm85, %v61, 0
    %89 = vmatprep.subr.bf16.mxu0 0
    %90 = vmatpush1.bf16.msra.mxu0 0
    %91 = vmatprep.subr.bf16.mxu0 0
    %92 = vmatpush1.bf16.msra.mxu0 0
    %93 = vmatprep.subr.bf16.mxu0 0
    %94 = vmatpush1.bf16.msra.mxu0 0
    %95 = vmatprep.subr.bf16.mxu0 0
    %96 = vmatpush1.bf16.msra.mxu0 0
    %97 = vmatprep.subr.bf16.mxu0 0
    %98 = vmatpush1.bf16.msra.mxu0 0
    %99 = vmatprep.subr.bf16.mxu0 0
    %100 = vmatpush1.bf16.msra.mxu0 0
    %101 = vmatprep.subr.bf16.mxu0 0
    %102 = vmatpush1.bf16.msra.mxu0 %v82
    %103 = vmatprep.subr.bf16.mxu0 0
    %104 = vmatpush1.bf16.msra.mxu0 %v81
    %105 = vmatprep.subr.bf16.mxu0 0
    %106 = vmatpush2.bf16.msra.mxu0 0
    %107 = vmatprep.subr.bf16.mxu0 0
    %108 = vmatpush2.bf16.msra.mxu0 0
    %109 = vmatprep.subr.bf16.mxu0 0
    %110 = vmatpush2.bf16.msra.mxu0 0
    %111 = vmatprep.subr.bf16.mxu0 0
    %112 = vmatpush2.bf16.msra.mxu0 0
    %113 = vmatprep.subr.bf16.mxu0 0
    %114 = vmatpush2.bf16.msra.mxu0 0
    %115 = vmatprep.subr.bf16.mxu0 0
    %116 = vmatpush2.bf16.msra.mxu0 0
    %117 = vmatprep.subr.bf16.mxu0 0
    %118 = vmatpush2.bf16.msra.mxu0 0
    %119 = vmatprep.subr.bf16.mxu0 0
    %120 = vmatpush2.bf16.msra.mxu0 0
    %121 = vmatprep.mubr.bf16.mxu0 0
    %122 = vmatmul.mubr.bf16.gmra.mxu0 %v87
    %v123 = vpop.f32.mrf.mxu0
    %v124 = vadd.f32 %v71, %v123
    %v125 = vpop.f32.mrf.mxu0
    %v126 = vpop.f32.mrf.mxu0
    %v127 = vpop.f32.mrf.mxu0
    %128 = vdwg.mxu0
    %v129 = vtanh.pop %v124
    %v130 = vpack.c.bf16 %v129, %v129
    %v131 = vld [vmem:[#allocation7] sm:$0xf]
    %v132 = vld [vmem:[#allocation7 + $0x4] sm:$0xf]
    %v133 = vld [vmem:[#allocation7 + $0x8] sm:$0xf]
    %v134 = vld [vmem:[#allocation7 + $0xc] sm:$0xf]
    %v135 = vld [vmem:[%s4] sm:$0x1]
    %v137 = vlaneseq
    %v138 = vshrl.u32 %v137, 7
    %v139 = vsub.s32 0, %v138
    %v140 = vrot.slane %v135, %v139
    %v146 = vunpack.c.l.b16 %v131
    %v147 = vunpack.c.l.b16 %v132
    %v148 = vunpack.c.l.b16 %v133
    %v149 = vunpack.c.l.b16 %v134
    %v150 = vpack.c.b16 %v147, %v146
    %v151 = vpack.c.b16 %v149, %v148
    %v155 = vsel %vm85, %v130, 0
    %157 = vmatprep.subr.bf16.mxu0 0
    %158 = vmatpush1.bf16.msra.mxu0 0
    %159 = vmatprep.subr.bf16.mxu0 0
    %160 = vmatpush1.bf16.msra.mxu0 0
    %161 = vmatprep.subr.bf16.mxu0 0
    %162 = vmatpush1.bf16.msra.mxu0 0
    %163 = vmatprep.subr.bf16.mxu0 0
    %164 = vmatpush1.bf16.msra.mxu0 0
    %165 = vmatprep.subr.bf16.mxu0 0
    %166 = vmatpush1.bf16.msra.mxu0 0
    %167 = vmatprep.subr.bf16.mxu0 0
    %168 = vmatpush1.bf16.msra.mxu0 0
    %169 = vmatprep.subr.bf16.mxu0 0
    %170 = vmatpush1.bf16.msra.mxu0 %v151
    %171 = vmatprep.subr.bf16.mxu0 0
    %172 = vmatpush1.bf16.msra.mxu0 %v150
    %173 = vmatprep.subr.bf16.mxu0 0
    %174 = vmatpush2.bf16.msra.mxu0 0
    %175 = vmatprep.subr.bf16.mxu0 0
    %176 = vmatpush2.bf16.msra.mxu0 0
    %177 = vmatprep.subr.bf16.mxu0 0
    %178 = vmatpush2.bf16.msra.mxu0 0
    %179 = vmatprep.subr.bf16.mxu0 0
    %180 = vmatpush2.bf16.msra.mxu0 0
    %181 = vmatprep.subr.bf16.mxu0 0
    %182 = vmatpush2.bf16.msra.mxu0 0
    %183 = vmatprep.subr.bf16.mxu0 0
    %184 = vmatpush2.bf16.msra.mxu0 0
    %185 = vmatprep.subr.bf16.mxu0 0
    %186 = vmatpush2.bf16.msra.mxu0 0
    %187 = vmatprep.subr.bf16.mxu0 0
    %188 = vmatpush2.bf16.msra.mxu0 0
    %189 = vmatprep.mubr.bf16.mxu0 0
    %190 = vmatmul.mubr.bf16.gmra.mxu0 %v155
    %v191 = vpop.f32.mrf.mxu0
    %v192 = vadd.f32 %v140, %v191
    %v193 = vpop.f32.mrf.mxu0
    %v194 = vpop.f32.mrf.mxu0
    %v195 = vpop.f32.mrf.mxu0
    %196 = vdwg.mxu0
    %v197 = vsub.f32 0.0, %v192
    %v198 = vmul.f32 %v197, 1.442695
    %v199 = vpow.pop %v198
    %v200 = vadd.f32 %v199, 1.0
    %v201 = vrcp.pop %v200
    %202 = vst [vmem:[#allocation8] sm:$0xff] %v201
    // Predicated region
    $region34: #{tpu_custom_call.1} parent=1 // pred_check
      _
    $region35: #{tpu_custom_call.1} parent=1 // pred_check_branch
      %204 = sbr.rel (0) target = $region37
    $region36: #{tpu_custom_call.1} parent=1 // pred_region
      %s206 = ssub.s32 128, 128
      %207 = vsyncadd [#allocation4], %s206
      %s209 = sshll.u32 [#allocation8], 4
      %s210 = int_to_ptr.vmem [resolvable:$true] %s209
      %212 = dma.vmem_to_hbm [thread:$0]  %s210, 128, %s5, [#allocation4]
    $region37: #{tpu_custom_call.1} parent=1 // pred_fallthru
      _
    // Predicated region
    $region38: #{tpu_custom_call.1} parent=1 // pred_check
      _
    $region39: #{tpu_custom_call.1} parent=1 // pred_check_branch
      %214 = sbr.rel (0) target = $region41
    $region40: #{tpu_custom_call.1} parent=1 // pred_region
      %215 = dma.done [#allocation4], 128
    $region41: #{tpu_custom_call.1} parent=1 // pred_fallthru
      _
    %216 = vsyncpa [#allocation3], 1
    %217 = vsyncpa [#allocation6], 1
    %218 = vsyncpa [#allocation4], 1

</llo_original>
